<compile_context>
chip_gen: v7x
topology: tpu7x:2x2x1
jax: 0.10.0
libtpu: 0.0.40
codegen_flags: <defaults>
</compile_context>

<pallas_src>
import jax
import jax.numpy as jnp
from jax import lax
from jax.experimental import pallas as pl
from jax.experimental.pallas import tpu as pltpu


def _round_up(v, m):
    return (v + m - 1) // m * m


def _fdrt_kernel(feat_ref, out_ref, gram_ref):
    """One grid step.

    feat_ref : (B_blk, c, hw_tile) VMEM tile, native input dtype
    out_ref  : (B_blk, 1, 128)     VMEM f32; per-batch sum((gram - I)^2),
               broadcast across 128 lanes (lane-dense store)
    gram_ref : (B_blk, c, c)       VMEM f32 scratch, resident across the hw axis
    """
    k = pl.program_id(1)
    nk = pl.num_programs(1)

    @pl.when(k == 0)
    def _():
        gram_ref[...] = jnp.zeros_like(gram_ref)

    f = feat_ref[...]
    # Batched A @ A^T: contract the last (lane) dim of both operands on the
    # MXU; no transposed copy is materialized.  f32 accumulation.
    gram_ref[...] += lax.dot_general(
        f, f,
        dimension_numbers=(((2,), (2,)), ((0,), (0,))),
        preferred_element_type=jnp.float32,
    )

    @pl.when(k == nk - 1)
    def _():
        gram = gram_ref[...]                                   # (B_blk, c, c) f32
        c = gram.shape[-1]
        # sum((gram - I)^2) = sum(gram^2) - 2*trace(gram) + c   (per batch elem)
        row = lax.broadcasted_iota(jnp.int32, gram.shape, 1)
        col = lax.broadcasted_iota(jnp.int32, gram.shape, 2)
        diag = row == col
        gg = jnp.sum(jnp.sum(gram * gram, axis=-1, keepdims=True),
                     axis=-2, keepdims=True)                   # (B_blk, 1, 1)
        tr = jnp.sum(jnp.sum(jnp.where(diag, gram, jnp.float32(0.0)),
                             axis=-1, keepdims=True),
                     axis=-2, keepdims=True)                   # (B_blk, 1, 1)
        per_b = gg - 2.0 * tr + jnp.float32(c)                 # (B_blk, 1, 1)
        out_ref[...] = jnp.broadcast_to(per_b, out_ref.shape)


def loss_fdrt(x, *, hw_tile=None, batch_block=None):
    """x: (b, c, h, w) array (NCHW). Returns scalar f32 loss."""
    b, c, h, w = x.shape
    hw = h * w
    feat = x.reshape(b, c, hw)

    # ---- batch blocking: amortize per-step overhead when c is small --------
    if batch_block is None:
        batch_block = min(b, 8) if c <= 64 else 1
    b_blk = max(1, min(batch_block, b))
    b_pad = _round_up(b, b_blk)

    # ---- hw (contraction) tiling: multiple of 128 lanes, VMEM-budgeted -----
    itemsize = jnp.dtype(x.dtype).itemsize
    hw_pad128 = _round_up(hw, 128)
    if hw_tile is None:
        # Keep the two double-buffered input blocks within ~10 MiB so the
        # kernel fits the scoped-VMEM default on v5e/v6e/v7x with headroom for
        # the f32 gram scratch and the tiny output block.
        budget = 10 * 1024 * 1024
        per_lane = 2 * b_blk * c * itemsize
        hw_tile = max(128, (budget // per_lane) // 128 * 128)
        hw_tile = min(hw_tile, 8192)
    hw_tile = max(128, _round_up(hw_tile, 128))
    hw_tile = min(hw_tile, hw_pad128)
    hw_pad = _round_up(hw, hw_tile)

    # Zero-pad: padded hw lanes contribute nothing to the gram; padded batch
    # rows are sliced away before the final reduction.
    if (b_pad != b) or (hw_pad != hw):
        feat = jnp.pad(feat, ((0, b_pad - b), (0, 0), (0, hw_pad - hw)))

    grid = (b_pad // b_blk, hw_pad // hw_tile)

    out = pl.pallas_call(
        _fdrt_kernel,
        out_shape=jax.ShapeDtypeStruct((b_pad, 1, 128), jnp.float32),
        grid=grid,
        in_specs=[pl.BlockSpec((b_blk, c, hw_tile), lambda i, k: (i, 0, k))],
        out_specs=pl.BlockSpec((b_blk, 1, 128), lambda i, k: (i, 0, 0)),
        scratch_shapes=[pltpu.VMEM((b_blk, c, c), jnp.float32)],
        compiler_params=pltpu.CompilerParams(
            dimension_semantics=("parallel", "arbitrary"),
            vmem_limit_bytes=32 * 1024 * 1024,
        ),
    )(feat)

    per_batch = out[:b, 0, 0]                                  # (b,) f32
    denom = jnp.float32(b) * jnp.float32(c) ** 4               # MSE/(c^2) == /(b*c^4)
    return jnp.sum(per_batch) / denom


def _loss_fdrt_ref(x):
    """Pure-JAX reference mirroring the PyTorch forward."""
    b, c, h, w = x.shape
    feat = x.reshape(b, c, h * w).astype(jnp.float32)
    gram = jnp.einsum("bcx,bdx->bcd", feat, feat)
    eye = jnp.broadcast_to(jnp.eye(c, dtype=jnp.float32), (b, c, c))
    return jnp.mean((gram - eye) ** 2) / (c ** 2)


if __name__ == "__main__":
    key = jax.random.PRNGKey(0)
    b, c, h, w = 2, 4, 16, 16
    x = jax.random.normal(key, (b, c, h, w), dtype=jnp.float32)

    out = jax.block_until_ready(loss_fdrt(x))
    ref = jax.block_until_ready(_loss_fdrt_ref(x))
    assert jnp.allclose(out, ref, rtol=1e-5, atol=1e-5), (out, ref)

    # Exercise the hw-tiling (multi-chunk contraction) and batch-padding paths
    # with forced small tiles on a slightly awkward batch size.
    x2 = jax.random.normal(jax.random.PRNGKey(0), (3, 4, 16, 16), dtype=jnp.float32)
    out2 = jax.block_until_ready(loss_fdrt(x2, hw_tile=128, batch_block=2))
    ref2 = jax.block_until_ready(_loss_fdrt_ref(x2))
    assert jnp.allclose(out2, ref2, rtol=1e-5, atol=1e-5), (out2, ref2)

    print("KERNEL_OK")
</pallas_src>

<mosaic_0001>
module attributes {stable_mosaic.version = 11 : i64} {
  func.func @_fdrt_kernel(%arg0: i32, %arg1: i32, %arg2: memref<2x4x256xf32, #tpu.memory_space<vmem>>, %arg3: memref<2x1x128xf32, #tpu.memory_space<vmem>>, %arg4: memref<2x4x4xf32, #tpu.memory_space<vmem>>) attributes {dimension_semantics = [#tpu.dimension_semantics<parallel>, #tpu.dimension_semantics<arbitrary>], iteration_bounds = array<i64: 1, 1>, scalar_prefetch = 0 : i64, scratch_operands = 1 : i64, tpu.core_type = #tpu.core_type<tc>, window_params = [{transform_indices = @transform_0, window_bounds = array<i64: 2, 4, 256>}, {transform_indices = @transform_1, window_bounds = array<i64: 2, 1, 128>}]} {
    %c0_i32 = arith.constant 0 : i32
    %0 = arith.cmpi eq, %arg1, %c0_i32 : i32
    %1 = arith.extui %0 : i1 to i32
    %c0_i32_0 = arith.constant 0 : i32
    %2 = arith.cmpi ne, %1, %c0_i32_0 : i32
    scf.if %2 {
      %cst_11 = arith.constant 0.000000e+00 : f32
      %11 = vector.broadcast %cst_11 : f32 to vector<2x4x4xf32>
      %c0_12 = arith.constant 0 : index
      %c0_13 = arith.constant 0 : index
      %c0_14 = arith.constant 0 : index
      %12 = vector.load %arg4[%c0_12, %c0_13, %c0_14] : memref<2x4x4xf32, #tpu.memory_space<vmem>>, vector<2x4x4xf32>
      tpu.vector_store %arg4[%c0_12, %c0_13, %c0_14], %11 {strides = array<i32>} : memref<2x4x4xf32, #tpu.memory_space<vmem>>, vector<2x4x4xf32>,
    } else {
    }
    %c0 = arith.constant 0 : index
    %c0_1 = arith.constant 0 : index
    %c0_2 = arith.constant 0 : index
    %3 = vector.load %arg2[%c0, %c0_1, %c0_2] : memref<2x4x256xf32, #tpu.memory_space<vmem>>, vector<2x4x256xf32>
    %c0_3 = arith.constant 0 : index
    %c0_4 = arith.constant 0 : index
    %c0_5 = arith.constant 0 : index
    %4 = vector.load %arg4[%c0_3, %c0_4, %c0_5] : memref<2x4x4xf32, #tpu.memory_space<vmem>>, vector<2x4x4xf32>
    %cst = arith.constant dense<0.000000e+00> : vector<2x4x4xf32>
    %5 = tpu.matmul %3, %3, %cst {dimension_numbers = #tpu.dot_dimension_numbers<[2], [2], [1], [1], [0, 0, 0, 1, 1, 1], [0], [0]>} : vector<2x4x256xf32>, vector<2x4x256xf32>, vector<2x4x4xf32> -> vector<2x4x4xf32>
    %6 = arith.addf %4, %5 : vector<2x4x4xf32>
    %c0_6 = arith.constant 0 : index
    %c0_7 = arith.constant 0 : index
    %c0_8 = arith.constant 0 : index
    %7 = vector.load %arg4[%c0_6, %c0_7, %c0_8] : memref<2x4x4xf32, #tpu.memory_space<vmem>>, vector<2x4x4xf32>
    tpu.vector_store %arg4[%c0_6, %c0_7, %c0_8], %6 {strides = array<i32>} : memref<2x4x4xf32, #tpu.memory_space<vmem>>, vector<2x4x4xf32>,
    %c0_i32_9 = arith.constant 0 : i32
    %8 = arith.cmpi eq, %arg1, %c0_i32_9 : i32
    %9 = arith.extui %8 : i1 to i32
    %c0_i32_10 = arith.constant 0 : i32
    %10 = arith.cmpi ne, %9, %c0_i32_10 : i32
    scf.if %10 {
      %c0_11 = arith.constant 0 : index
      %c0_12 = arith.constant 0 : index
      %c0_13 = arith.constant 0 : index
      %11 = vector.load %arg4[%c0_11, %c0_12, %c0_13] : memref<2x4x4xf32, #tpu.memory_space<vmem>>, vector<2x4x4xf32>
      %12 = tpu.iota {dimensions = array<i32: 1>} : vector<2x4x4xi32>
      %13 = tpu.iota {dimensions = array<i32: 2>} : vector<2x4x4xi32>
      %14 = arith.cmpi eq, %12, %13 : vector<2x4x4xi32>
      %15 = arith.mulf %11, %11 : vector<2x4x4xf32>
      %cst_14 = arith.constant dense<0.000000e+00> : vector<2x4xf32>
      %16 = vector.multi_reduction <add>, %15, %cst_14 [2] : vector<2x4x4xf32> to vector<2x4xf32>
      %17 = vector.shape_cast %16 : vector<2x4xf32> to vector<2x4x1xf32>
      %cst_15 = arith.constant dense<0.000000e+00> : vector<2x1xf32>
      %18 = vector.multi_reduction <add>, %17, %cst_15 [1] : vector<2x4x1xf32> to vector<2x1xf32>
      %19 = vector.shape_cast %18 : vector<2x1xf32> to vector<2x1x1xf32>
      %cst_16 = arith.constant 0.000000e+00 : f32
      %20 = vector.broadcast %cst_16 : f32 to vector<2x4x4xf32>
      %21 = arith.select %14, %11, %20 : vector<2x4x4xi1>, vector<2x4x4xf32>
      %cst_17 = arith.constant dense<0.000000e+00> : vector<2x4xf32>
      %22 = vector.multi_reduction <add>, %21, %cst_17 [2] : vector<2x4x4xf32> to vector<2x4xf32>
      %23 = vector.shape_cast %22 : vector<2x4xf32> to vector<2x4x1xf32>
      %cst_18 = arith.constant dense<0.000000e+00> : vector<2x1xf32>
      %24 = vector.multi_reduction <add>, %23, %cst_18 [1] : vector<2x4x1xf32> to vector<2x1xf32>
      %25 = vector.shape_cast %24 : vector<2x1xf32> to vector<2x1x1xf32>
      %cst_19 = arith.constant 2.000000e+00 : f32
      %26 = vector.broadcast %cst_19 : f32 to vector<2x1x1xf32>
      %27 = arith.mulf %26, %25 : vector<2x1x1xf32>
      %28 = arith.subf %19, %27 : vector<2x1x1xf32>
      %cst_20 = arith.constant 4.000000e+00 : f32
      %29 = vector.broadcast %cst_20 : f32 to vector<2x1x1xf32>
      %30 = arith.addf %28, %29 : vector<2x1x1xf32>
      %31 = vector.shape_cast %30 : vector<2x1x1xf32> to vector<2x1x1xf32>
      %32 = vector.broadcast %31 : vector<2x1x1xf32> to vector<2x1x128xf32>
      %c0_21 = arith.constant 0 : index
      %c0_22 = arith.constant 0 : index
      %c0_23 = arith.constant 0 : index
      %33 = vector.load %arg3[%c0_21, %c0_22, %c0_23] : memref<2x1x128xf32, #tpu.memory_space<vmem>>, vector<2x1x128xf32>
      tpu.vector_store %arg3[%c0_21, %c0_22, %c0_23], %32 {strides = array<i32>} : memref<2x1x128xf32, #tpu.memory_space<vmem>>, vector<2x1x128xf32>,
    } else {
    }
    return
  }
  func.func @transform_0(%arg0: i32, %arg1: i32) -> (i32, i32, i32) {
    %c0_i32 = arith.constant 0 : i32
    %c0_i32_0 = arith.constant 0 : i32
    return %arg0, %c0_i32, %arg1 : i32, i32, i32
  }
  func.func @transform_1(%arg0: i32, %arg1: i32) -> (i32, i32, i32) {
    %c0_i32 = arith.constant 0 : i32
    %c0_i32_0 = arith.constant 0 : i32
    %c0_i32_1 = arith.constant 0 : i32
    return %arg0, %c0_i32, %c0_i32_0 : i32, i32, i32
  }
}

</mosaic_0001>

<llo_original>
// kernel: tpu_custom_call.1
$region0: #{tpu_custom_call.1}
  #allocation0 [shape = 'u32[]', space=smem, size = 0x4, offset = 0x4, fixed_abs, tag = 'smem constant byte address 0x4 - core index']
  #allocation1 [shape = 'u32[144,128]{1,0:T(1,128)}', space=vmem, size = 0x12000, scoped, tag = 'internal scratch']
  #allocation2 [shape = 'f32[2,4,4]{2,1,0:T(4,128)}', space=vmem, size = 0x1000, scoped, tag = 'scratch operand']
  %s0 = inlined_call_operand.hbm [shape: f32[2,4,256], index: 0, kind: input, shape index: {}]
  %s1 = inlined_call_operand.hbm [shape: f32[2,1,128], index: 1, kind: output, shape index: {}]
  %s2 = sld [smem:[#allocation0]]
  $region26: #{tpu_custom_call.1} parent=0
    _
  %s4 = ssub.s32 1, %s2
  %s5 = scalar_select 0, %s4, %s2
  $region1: #{tpu_custom_call.1} parent=0
    #allocation3 [shape = 'u8[8192]{0}', space=vmem, size = 0x2000, scoped, tag = 'input window, operand 0, single buffered']
    #allocation4 [shape = 's32[1]{0}', space=sflag, size = 0x4, scoped, tag = 'scoped memory for tpu_custom_call.1']
    #allocation5 [shape = 's32[1]{0}', space=sflag, size = 0x4, scoped, tag = 'scoped memory for tpu_custom_call.1']
    #allocation6 [shape = 'u8[1024]{0}', space=vmem, size = 0x400, scoped, tag = 'output window, operand 0, single buffered']
    %6 = vsyncpa [#allocation4], 0
    %7 = vsyncpa [#allocation5], 0
    // Predicated region
    $region2: #{tpu_custom_call.1} parent=1 // pred_check
      _
    $region3: #{tpu_custom_call.1} parent=1 // pred_check_branch
      %9 = sbr.rel (0) target = $region5
    $region4: #{tpu_custom_call.1} parent=1 // pred_region
      %s11 = ssub.s32 256, 256
      %12 = vsyncadd [#allocation4], %s11
      %s13 = sshll.u32 [#allocation3], 4
      %s14 = int_to_ptr.vmem [resolvable:$true] %s13
      %19 = dma.hbm_to_vmem [thread:$0]  %s0, 256, %s14, [#allocation4], 128, 128, 8
    $region5: #{tpu_custom_call.1} parent=1 // pred_fallthru
      _
    // Predicated region
    $region6: #{tpu_custom_call.1} parent=1 // pred_check
      _
    $region7: #{tpu_custom_call.1} parent=1 // pred_check_branch
      %21 = sbr.rel (0) target = $region9
    $region8: #{tpu_custom_call.1} parent=1 // pred_region
      %22 = dma.done [#allocation4], 256
    $region9: #{tpu_custom_call.1} parent=1 // pred_fallthru
      _
    %p23 = scmp.eq.s32.totalorder 0, 0
    // Predicated region
    $region10: #{tpu_custom_call.1} parent=1 // pred_check
      %p24 = pneg %p23
    $region11: #{tpu_custom_call.1} parent=1 // pred_check_branch
      %26 = sbr.rel (%p24) target = $region13
    $region12: #{tpu_custom_call.1} parent=1 // pred_region
      %vm27 = vcmask 27648
      %28 = vst.msk [vmem:[#allocation2] sm:$0xf] %vm27, 0.0
      %29 = vst.msk [vmem:[#allocation2 + $0x4] sm:$0xf] %vm27, 0.0
    $region13: #{tpu_custom_call.1} parent=1 // pred_fallthru
      _
    %v30 = vld [vmem:[#allocation3] sm:$0xff]
    %v31 = vld [vmem:[#allocation3 + $0x8] sm:$0xff]
    %v32 = vld [vmem:[#allocation2] sm:$0xf]
    %v33 = vld [vmem:[#allocation2 + $0x4] sm:$0xf]
    %v35 = vcombine.high %v30, %v30
    %37 = vmatprep.subr.mxu0 %v35
    %38 = vmatpush1.xpose.msra.mxu0 %v30
    %39 = vmatprep.subr.mxu0 0.0
    %40 = vmatpush1.xpose.msra.mxu0 0.0
    %41 = vmatprep.subr.mxu0 0.0
    %42 = vmatpush1.xpose.msra.mxu0 0.0
    %43 = vmatprep.subr.mxu0 0.0
    %44 = vmatpush1.xpose.msra.mxu0 0.0
    %45 = vmatprep.subr.mxu0 0.0
    %46 = vmatpush1.xpose.msra.mxu0 0.0
    %47 = vmatprep.subr.mxu0 0.0
    %48 = vmatpush1.xpose.msra.mxu0 0.0
    %49 = vmatprep.subr.mxu0 0.0
    %50 = vmatpush1.xpose.msra.mxu0 0.0
    %51 = vmatprep.subr.mxu0 0.0
    %52 = vmatpush1.xpose.msra.mxu0 0.0
    %53 = vmatprep.subr.mxu0 0.0
    %54 = vmatpush1.xpose.msra.mxu0 0.0
    %55 = vmatprep.subr.mxu0 0.0
    %56 = vmatpush1.xpose.msra.mxu0 0.0
    %57 = vmatprep.subr.mxu0 0.0
    %58 = vmatpush1.xpose.msra.mxu0 0.0
    %59 = vmatprep.subr.mxu0 0.0
    %60 = vmatpush1.xpose.msra.mxu0 0.0
    %61 = vmatprep.subr.mxu0 0.0
    %62 = vmatpush1.xpose.msra.mxu0 0.0
    %63 = vmatprep.subr.mxu0 0.0
    %64 = vmatpush1.xpose.msra.mxu0 0.0
    %65 = vmatprep.subr.mxu0 0.0
    %66 = vmatpush1.xpose.msra.mxu0 0.0
    %67 = vmatprep.subr.mxu0 0.0
    %68 = vmatpush1.xpose.msra.mxu0 0.0
    %69 = vmatprep.subr.mxu0 0.0
    %70 = vmatpush1.xpose.msra.mxu0 0.0
    %71 = vmatprep.subr.mxu0 0.0
    %72 = vmatpush1.xpose.msra.mxu0 0.0
    %73 = vmatprep.subr.mxu0 0.0
    %74 = vmatpush1.xpose.msra.mxu0 0.0
    %75 = vmatprep.subr.mxu0 0.0
    %76 = vmatpush1.xpose.msra.mxu0 0.0
    %77 = vmatprep.subr.mxu0 0.0
    %78 = vmatpush1.xpose.msra.mxu0 0.0
    %79 = vmatprep.subr.mxu0 0.0
    %80 = vmatpush1.xpose.msra.mxu0 0.0
    %81 = vmatprep.subr.mxu0 0.0
    %82 = vmatpush1.xpose.msra.mxu0 0.0
    %83 = vmatprep.subr.mxu0 0.0
    %84 = vmatpush1.xpose.msra.mxu0 0.0
    %85 = vmatprep.subr.mxu0 0.0
    %86 = vmatpush1.xpose.msra.mxu0 0.0
    %87 = vmatprep.subr.mxu0 0.0
    %88 = vmatpush1.xpose.msra.mxu0 0.0
    %89 = vmatprep.subr.mxu0 0.0
    %90 = vmatpush1.xpose.msra.mxu0 0.0
    %91 = vmatprep.subr.mxu0 0.0
    %92 = vmatpush1.xpose.msra.mxu0 0.0
    %93 = vmatprep.subr.mxu0 0.0
    %94 = vmatpush1.xpose.msra.mxu0 0.0
    %95 = vmatprep.subr.mxu0 0.0
    %96 = vmatpush1.xpose.msra.mxu0 0.0
    %97 = vmatprep.subr.mxu0 0.0
    %98 = vmatpush1.xpose.msra.mxu0 0.0
    %99 = vmatprep.subr.mxu0 0.0
    %100 = vmatpush1.xpose.msra.mxu0 0.0
    %101 = vmatprep.mubr.f32.mxu0 %v35
    %102 = vmatmul.mubr.f32.gmra.mrb[0].mxu0 %v30
    %v103 = vpop.f32.mrb[0].mxu0
    %v104 = vadd.f32 0.0, %v103
    %v105 = vpop.f32.mrb[0].mxu0
    %106 = vdwg.mxu0
    %v108 = vcombine.high %v31, %v31
    %110 = vmatprep.subr.mxu0 %v108
    %111 = vmatpush1.xpose.msra.mxu0 %v31
    %112 = vmatprep.subr.mxu0 0.0
    %113 = vmatpush1.xpose.msra.mxu0 0.0
    %114 = vmatprep.subr.mxu0 0.0
    %115 = vmatpush1.xpose.msra.mxu0 0.0
    %116 = vmatprep.subr.mxu0 0.0
    %117 = vmatpush1.xpose.msra.mxu0 0.0
    %118 = vmatprep.subr.mxu0 0.0
    %119 = vmatpush1.xpose.msra.mxu0 0.0
    %120 = vmatprep.subr.mxu0 0.0
    %121 = vmatpush1.xpose.msra.mxu0 0.0
    %122 = vmatprep.subr.mxu0 0.0
    %123 = vmatpush1.xpose.msra.mxu0 0.0
    %124 = vmatprep.subr.mxu0 0.0
    %125 = vmatpush1.xpose.msra.mxu0 0.0
    %126 = vmatprep.subr.mxu0 0.0
    %127 = vmatpush1.xpose.msra.mxu0 0.0
    %128 = vmatprep.subr.mxu0 0.0
    %129 = vmatpush1.xpose.msra.mxu0 0.0
    %130 = vmatprep.subr.mxu0 0.0
    %131 = vmatpush1.xpose.msra.mxu0 0.0
    %132 = vmatprep.subr.mxu0 0.0
    %133 = vmatpush1.xpose.msra.mxu0 0.0
    %134 = vmatprep.subr.mxu0 0.0
    %135 = vmatpush1.xpose.msra.mxu0 0.0
    %136 = vmatprep.subr.mxu0 0.0
    %137 = vmatpush1.xpose.msra.mxu0 0.0
    %138 = vmatprep.subr.mxu0 0.0
    %139 = vmatpush1.xpose.msra.mxu0 0.0
    %140 = vmatprep.subr.mxu0 0.0
    %141 = vmatpush1.xpose.msra.mxu0 0.0
    %142 = vmatprep.subr.mxu0 0.0
    %143 = vmatpush1.xpose.msra.mxu0 0.0
    %144 = vmatprep.subr.mxu0 0.0
    %145 = vmatpush1.xpose.msra.mxu0 0.0
    %146 = vmatprep.subr.mxu0 0.0
    %147 = vmatpush1.xpose.msra.mxu0 0.0
    %148 = vmatprep.subr.mxu0 0.0
    %149 = vmatpush1.xpose.msra.mxu0 0.0
    %150 = vmatprep.subr.mxu0 0.0
    %151 = vmatpush1.xpose.msra.mxu0 0.0
    %152 = vmatprep.subr.mxu0 0.0
    %153 = vmatpush1.xpose.msra.mxu0 0.0
    %154 = vmatprep.subr.mxu0 0.0
    %155 = vmatpush1.xpose.msra.mxu0 0.0
    %156 = vmatprep.subr.mxu0 0.0
    %157 = vmatpush1.xpose.msra.mxu0 0.0
    %158 = vmatprep.subr.mxu0 0.0
    %159 = vmatpush1.xpose.msra.mxu0 0.0
    %160 = vmatprep.subr.mxu0 0.0
    %161 = vmatpush1.xpose.msra.mxu0 0.0
    %162 = vmatprep.subr.mxu0 0.0
    %163 = vmatpush1.xpose.msra.mxu0 0.0
    %164 = vmatprep.subr.mxu0 0.0
    %165 = vmatpush1.xpose.msra.mxu0 0.0
    %166 = vmatprep.subr.mxu0 0.0
    %167 = vmatpush1.xpose.msra.mxu0 0.0
    %168 = vmatprep.subr.mxu0 0.0
    %169 = vmatpush1.xpose.msra.mxu0 0.0
    %170 = vmatprep.subr.mxu0 0.0
    %171 = vmatpush1.xpose.msra.mxu0 0.0
    %172 = vmatprep.subr.mxu0 0.0
    %173 = vmatpush1.xpose.msra.mxu0 0.0
    %174 = vmatprep.mubr.f32.mxu0 %v108
    %175 = vmatmul.mubr.f32.gmra.mrb[0].mxu0 %v31
    %v176 = vpop.f32.mrb[0].mxu0
    %v177 = vadd.f32 0.0, %v176
    %v178 = vpop.f32.mrb[0].mxu0
    %179 = vdwg.mxu0
    %v180 = vadd.f32 %v32, %v104
    %v181 = vadd.f32 %v33, %v177
    %vm182 = vcmask 27648
    %183 = vst.msk [vmem:[#allocation2] sm:$0xf] %vm182, %v180
    %184 = vst.msk [vmem:[#allocation2 + $0x4] sm:$0xf] %vm182, %v181
    // Predicated region
    $region14: #{tpu_custom_call.1} parent=1 // pred_check
      %p185 = pneg %p23
    $region15: #{tpu_custom_call.1} parent=1 // pred_check_branch
      %187 = sbr.rel (%p185) target = $region17
    $region16: #{tpu_custom_call.1} parent=1 // pred_region
      %v188 = vld [vmem:[#allocation2] sm:$0xf]
      %v189 = vld [vmem:[#allocation2 + $0x4] sm:$0xf]
      %v190 = vlaneseq
      %v191 = vshrl.u32 %v190, 7
      %v192 = vlaneseq
      %v193 = vand.u32 %v192, 127
      %vm194 = vcmp.eq.s32.totalorder %v191, %v193
      %v195 = vmul.f32 %v188, %v188
      %v196 = vmul.f32 %v189, %v189
      %v197 = vsel %vm182, %v195, 0.0
      %198 = vadd.xlane.f32.xlu0 %v197
      %v199 = vpop.xlane.xlu0 %198
      %v200 = vsel %vm182, %v196, 0.0
      %201 = vadd.xlane.f32.xlu0 %v200
      %v202 = vpop.xlane.xlu0 %201
      %vm203 = vcmask 1043456
      %v204 = vsel %vm203, %v199, 0.0
      %v205 = vrot.slane %v204, 4
      %v206 = vadd.f32 %v204, %v205
      %v207 = vrot.slane %v206, 2
      %v208 = vadd.f32 %v206, %v207
      %v209 = vrot.slane %v208, 1
      %v210 = vadd.f32 %v208, %v209
      %v211 = vsel %vm203, %v202, 0.0
      %v212 = vrot.slane %v211, 4
      %v213 = vadd.f32 %v211, %v212
      %v214 = vrot.slane %v213, 2
      %v215 = vadd.f32 %v213, %v214
      %v216 = vrot.slane %v215, 1
      %v217 = vadd.f32 %v215, %v216
      %v218 = vsel %vm194, %v188, 0.0
      %v219 = vsel %vm194, %v189, 0.0
      %v220 = vsel %vm182, %v218, 0.0
      %221 = vadd.xlane.f32.xlu0 %v220
      %v222 = vpop.xlane.xlu0 %221
      %v223 = vsel %vm182, %v219, 0.0
      %224 = vadd.xlane.f32.xlu0 %v223
      %v225 = vpop.xlane.xlu0 %224
      %v226 = vsel %vm203, %v222, 0.0
      %v227 = vrot.slane %v226, 4
      %v228 = vadd.f32 %v226, %v227
      %v229 = vrot.slane %v228, 2
      %v230 = vadd.f32 %v228, %v229
      %v231 = vrot.slane %v230, 1
      %v232 = vadd.f32 %v230, %v231
      %v233 = vsel %vm203, %v225, 0.0
      %v234 = vrot.slane %v233, 4
      %v235 = vadd.f32 %v233, %v234
      %v236 = vrot.slane %v235, 2
      %v237 = vadd.f32 %v235, %v236
      %v238 = vrot.slane %v237, 1
      %v239 = vadd.f32 %v237, %v238
      %v240 = vmul.f32 %v232, 2.0
      %v241 = vmul.f32 %v239, 2.0
      %v242 = vsub.f32 %v210, %v240
      %v243 = vsub.f32 %v217, %v241
      %v244 = vadd.f32 %v242, 4.0
      %v245 = vadd.f32 %v243, 4.0
      %246 = vst [vmem:[#allocation6] sm:$0x1] %v244
      %247 = vst [vmem:[#allocation6 + $0x1] sm:$0x1] %v245
    $region17: #{tpu_custom_call.1} parent=1 // pred_fallthru
      _
    // Predicated region
    $region18: #{tpu_custom_call.1} parent=1 // pred_check
      _
    $region19: #{tpu_custom_call.1} parent=1 // pred_check_branch
      %249 = sbr.rel (0) target = $region21
    $region20: #{tpu_custom_call.1} parent=1 // pred_region
      %s251 = ssub.s32 32, 32
      %252 = vsyncadd [#allocation5], %s251
      %s253 = sshll.u32 [#allocation6], 4
      %s254 = int_to_ptr.vmem [resolvable:$true] %s253
      %259 = dma.vmem_to_hbm [thread:$0]  %s254, 32, %s1, [#allocation5], 16, 16, 1
    $region21: #{tpu_custom_call.1} parent=1 // pred_fallthru
      _
    // Predicated region
    $region22: #{tpu_custom_call.1} parent=1 // pred_check
      _
    $region23: #{tpu_custom_call.1} parent=1 // pred_check_branch
      %261 = sbr.rel (0) target = $region25
    $region24: #{tpu_custom_call.1} parent=1 // pred_region
      %262 = dma.done [#allocation5], 32
    $region25: #{tpu_custom_call.1} parent=1 // pred_fallthru
      _
    %263 = vsyncpa [#allocation4], 1
    %264 = vsyncpa [#allocation5], 1

</llo_original>
